<compile_context>
chip_gen: v6e
topology: v6e:2x2x1
jax: 0.10.0
libtpu: 0.0.40
codegen_flags: <defaults>
</compile_context>

<pallas_src>
import jax
import jax.numpy as jnp
from jax import lax
from jax.experimental import pallas as pl
from jax.experimental.pallas import tpu as pltpu


def _mlp_kernel(w1t_ref, b1_ref, w2_ref, b2_ref, x_ref, o_ref):
    # x_ref : (block_b, d_in) tile of x in its native batch-major layout.
    # w1t_ref: (H8, d_in) f32   b1_ref / w2_ref: (H8, 1) f32   b2_ref: (1, 1) f32
    x = x_ref[...].astype(jnp.float32)               # (block_b, d_in)

    # Layer 1 on the MXU: contract d_in of both operands ("A @ B^T" form) so
    # the result is (H8, block_b) with the batch on the lane/N axis.
    h = lax.dot_general(
        w1t_ref[...], x,
        dimension_numbers=(((1,), (1,)), ((), ())),
        preferred_element_type=jnp.float32)          # (H8, block_b)

    h = jnp.maximum(h + b1_ref[...], 0.0)            # bias + ReLU (dense VPU)

    # Layer 2: per-unit scale (VPU) + sublane reduction (XLU) + output bias.
    # Padded hidden rows (>= d_hidden) are zero in both W1^T and w2 -> no-op.
    y = jnp.sum(h * w2_ref[...], axis=0, keepdims=True) + b2_ref[...]

    o_ref[...] = y.astype(o_ref.dtype)               # (1, block_b), lane-dense


def _pick_block_b(batch, requested):
    """Lane-aligned batch tile: big (amortize per-step overhead), but capped at
    ~half the batch so there are always >= 2 tiles for megacore sharding."""
    bb = max(128, (requested // 128) * 128)
    half = max(128, ((pl.cdiv(batch, 2) + 127) // 128) * 128)
    return min(bb, half)


def net_forward(x, w1, b1, w2, b2, *, block_b=16384):
    """Forward pass of Net.  x: (B, d_in) -> (B, 1).

    Parameter layouts (transposed vs. PyTorch's (out, in)):
      w1: (d_in, d_hidden)   b1: (d_hidden,)   w2: (d_hidden,)   b2: (1,)
    """
    B, d_in = x.shape
    d_hidden = b1.shape[0]
    H8 = max(8, ((d_hidden + 7) // 8) * 8)           # pad hidden to full sublanes

    bb = _pick_block_b(B, block_b)
    n_tiles = pl.cdiv(B, bb)
    Bp = n_tiles * bb                                # padded output width only

    f32 = jnp.float32
    w1t = jnp.zeros((H8, d_in), f32).at[:d_hidden, :].set(w1.T.astype(f32))
    b1p = jnp.zeros((H8, 1), f32).at[:d_hidden, 0].set(b1.astype(f32))
    w2p = jnp.zeros((H8, 1), f32).at[:d_hidden, 0].set(w2.astype(f32))
    b2p = b2.reshape(1, 1).astype(f32)

    out = pl.pallas_call(
        _mlp_kernel,
        out_shape=jax.ShapeDtypeStruct((1, Bp), x.dtype),
        grid=(n_tiles,),
        in_specs=[
            pl.BlockSpec((H8, d_in), lambda i: (0, 0)),     # W1^T (VMEM, resident)
            pl.BlockSpec((H8, 1), lambda i: (0, 0)),        # b1
            pl.BlockSpec((H8, 1), lambda i: (0, 0)),        # w2
            pl.BlockSpec((1, 1), lambda i: (0, 0)),         # b2
            pl.BlockSpec((bb, d_in), lambda i: (i, 0)),     # x tile (native layout)
        ],
        out_specs=pl.BlockSpec((1, bb), lambda i: (0, i)),  # lane-dense output row
        compiler_params=pltpu.CompilerParams(
            dimension_semantics=("parallel",),
            vmem_limit_bytes=32 * 1024 * 1024,
        ),
    )(w1t, b1p, w2p, b2p, x)

    return out[0, :B][:, None]                       # back to (B, 1)


def init_params(key, d_in=10, k=2):
    """Deterministic init mimicking PyTorch nn.Linear default U[-1/sqrt(fan_in), +]."""
    d_hidden = d_in // k
    k1, k2, k3, k4 = jax.random.split(key, 4)
    bound1 = 1.0 / jnp.sqrt(d_in)
    bound2 = 1.0 / jnp.sqrt(d_hidden)
    w1 = jax.random.uniform(k1, (d_in, d_hidden), jnp.float32, -bound1, bound1)
    b1 = jax.random.uniform(k2, (d_hidden,), jnp.float32, -bound1, bound1)
    w2 = jax.random.uniform(k3, (d_hidden,), jnp.float32, -bound2, bound2)
    b2 = jax.random.uniform(k4, (1,), jnp.float32, -bound2, bound2)
    return w1, b1, w2, b2


def _reference(x, w1, b1, w2, b2):
    # Exact f32 elementwise reference (avoids XLA's default-precision matmul).
    h = jnp.maximum(jnp.sum(x[:, :, None] * w1[None, :, :], axis=1) + b1[None, :], 0.0)
    return jnp.sum(h * w2[None, :], axis=1, keepdims=True) + b2[0]


if __name__ == "__main__":
    d_in, k = 10, 2
    key = jax.random.PRNGKey(0)
    kp, kx1, kx2 = jax.random.split(key, 3)
    w1, b1, w2, b2 = init_params(kp, d_in=d_in, k=k)

    # Case 1: batch 1024 -> two 512-lane tiles (exercises the parallel grid).
    x1 = jax.random.normal(kx1, (1024, d_in), jnp.float32)
    out1 = jax.block_until_ready(net_forward(x1, w1, b1, w2, b2))
    assert out1.shape == (1024, 1)
    ref1 = _reference(x1, w1, b1, w2, b2)
    assert jnp.allclose(out1, ref1, atol=1e-4, rtol=1e-4), float(jnp.max(jnp.abs(out1 - ref1)))

    # Case 2: ragged batch 200 -> last tile is partially out-of-range and
    # handled by Pallas block masking (no jnp.pad of x anywhere).
    x2 = jax.random.normal(kx2, (200, d_in), jnp.float32)
    out2 = jax.block_until_ready(net_forward(x2, w1, b1, w2, b2))
    assert out2.shape == (200, 1)
    ref2 = _reference(x2, w1, b1, w2, b2)
    assert jnp.allclose(out2, ref2, atol=1e-4, rtol=1e-4), float(jnp.max(jnp.abs(out2 - ref2)))

    print("KERNEL_OK")
</pallas_src>

<mosaic_0001>
module attributes {stable_mosaic.version = 11 : i64} {
  func.func @_mlp_kernel(%arg0: i32, %arg1: memref<8x10xf32, #tpu.memory_space<vmem>>, %arg2: memref<8x1xf32, #tpu.memory_space<vmem>>, %arg3: memref<8x1xf32, #tpu.memory_space<vmem>>, %arg4: memref<1x1xf32, #tpu.memory_space<vmem>>, %arg5: memref<512x10xf32, #tpu.memory_space<vmem>>, %arg6: memref<1x512xf32, #tpu.memory_space<vmem>>) attributes {dimension_semantics = [#tpu.dimension_semantics<parallel>], iteration_bounds = array<i64: 2>, scalar_prefetch = 0 : i64, scratch_operands = 0 : i64, tpu.core_type = #tpu.core_type<tc>, window_params = [{pipeline_mode = #tpu.pipeline_mode<synchronous>, transform_indices = @transform_0, window_bounds = array<i64: 8, 10>}, {pipeline_mode = #tpu.pipeline_mode<synchronous>, transform_indices = @transform_1, window_bounds = array<i64: 8, 1>}, {pipeline_mode = #tpu.pipeline_mode<synchronous>, transform_indices = @transform_2, window_bounds = array<i64: 8, 1>}, {pipeline_mode = #tpu.pipeline_mode<synchronous>, transform_indices = @transform_3, window_bounds = array<i64: 1, 1>}, {transform_indices = @transform_4, window_bounds = array<i64: 512, 10>}, {transform_indices = @transform_5, window_bounds = array<i64: 1, 512>}]} {
    %c0 = arith.constant 0 : index
    %c0_0 = arith.constant 0 : index
    %0 = vector.load %arg5[%c0, %c0_0] : memref<512x10xf32, #tpu.memory_space<vmem>>, vector<512x10xf32>
    %c0_1 = arith.constant 0 : index
    %c0_2 = arith.constant 0 : index
    %1 = vector.load %arg1[%c0_1, %c0_2] : memref<8x10xf32, #tpu.memory_space<vmem>>, vector<8x10xf32>
    %cst = arith.constant dense<0.000000e+00> : vector<8x512xf32>
    %2 = tpu.matmul %1, %0, %cst {dimension_numbers = #tpu.dot_dimension_numbers<[1], [1], [0], [0], [0, 0, 1, 0], [], []>} : vector<8x10xf32>, vector<512x10xf32>, vector<8x512xf32> -> vector<8x512xf32>
    %c0_3 = arith.constant 0 : index
    %c0_4 = arith.constant 0 : index
    %3 = vector.load %arg2[%c0_3, %c0_4] : memref<8x1xf32, #tpu.memory_space<vmem>>, vector<8x1xf32>
    %4 = vector.broadcast %3 : vector<8x1xf32> to vector<8x512xf32>
    %5 = arith.addf %2, %4 : vector<8x512xf32>
    %cst_5 = arith.constant 0.000000e+00 : f32
    %6 = vector.broadcast %cst_5 : f32 to vector<8x512xf32>
    %7 = arith.maximumf %5, %6 : vector<8x512xf32>
    %c0_6 = arith.constant 0 : index
    %c0_7 = arith.constant 0 : index
    %8 = vector.load %arg3[%c0_6, %c0_7] : memref<8x1xf32, #tpu.memory_space<vmem>>, vector<8x1xf32>
    %9 = vector.broadcast %8 : vector<8x1xf32> to vector<8x512xf32>
    %10 = arith.mulf %7, %9 : vector<8x512xf32>
    %cst_8 = arith.constant dense<0.000000e+00> : vector<512xf32>
    %11 = vector.multi_reduction <add>, %10, %cst_8 [0] : vector<8x512xf32> to vector<512xf32>
    %12 = vector.shape_cast %11 : vector<512xf32> to vector<1x512xf32>
    %c0_9 = arith.constant 0 : index
    %c0_10 = arith.constant 0 : index
    %13 = vector.load %arg4[%c0_9, %c0_10] : memref<1x1xf32, #tpu.memory_space<vmem>>, vector<1x1xf32>
    %14 = vector.broadcast %13 : vector<1x1xf32> to vector<1x512xf32>
    %15 = arith.addf %12, %14 : vector<1x512xf32>
    %c0_11 = arith.constant 0 : index
    %c0_12 = arith.constant 0 : index
    %16 = vector.load %arg6[%c0_11, %c0_12] : memref<1x512xf32, #tpu.memory_space<vmem>>, vector<1x512xf32>
    tpu.vector_store %arg6[%c0_11, %c0_12], %15 {strides = array<i32>} : memref<1x512xf32, #tpu.memory_space<vmem>>, vector<1x512xf32>,
    return
  }
  func.func @transform_0(%arg0: i32) -> (i32, i32) {
    %c0_i32 = arith.constant 0 : i32
    %c0_i32_0 = arith.constant 0 : i32
    %c0_i32_1 = arith.constant 0 : i32
    return %c0_i32, %c0_i32_0 : i32, i32
  }
  func.func @transform_1(%arg0: i32) -> (i32, i32) {
    %c0_i32 = arith.constant 0 : i32
    %c0_i32_0 = arith.constant 0 : i32
    %c0_i32_1 = arith.constant 0 : i32
    return %c0_i32, %c0_i32_0 : i32, i32
  }
  func.func @transform_2(%arg0: i32) -> (i32, i32) {
    %c0_i32 = arith.constant 0 : i32
    %c0_i32_0 = arith.constant 0 : i32
    %c0_i32_1 = arith.constant 0 : i32
    return %c0_i32, %c0_i32_0 : i32, i32
  }
  func.func @transform_3(%arg0: i32) -> (i32, i32) {
    %c0_i32 = arith.constant 0 : i32
    %c0_i32_0 = arith.constant 0 : i32
    %c0_i32_1 = arith.constant 0 : i32
    return %c0_i32, %c0_i32_0 : i32, i32
  }
  func.func @transform_4(%arg0: i32) -> (i32, i32) {
    %c0_i32 = arith.constant 0 : i32
    %c0_i32_0 = arith.constant 0 : i32
    return %arg0, %c0_i32 : i32, i32
  }
  func.func @transform_5(%arg0: i32) -> (i32, i32) {
    %c0_i32 = arith.constant 0 : i32
    %c0_i32_0 = arith.constant 0 : i32
    return %c0_i32, %arg0 : i32, i32
  }
}

</mosaic_0001>

<llo_original>
// kernel: tpu_custom_call.1
$region0: #{tpu_custom_call.1}
  #allocation0 [shape = 'u32[]', space=smem, size = 0x4, offset = 0x4, fixed_abs, tag = 'smem constant byte address 0x4 - core index']
  #allocation1 [shape = 'u32[144,128]{1,0:T(1,128)}', space=vmem, size = 0x12000, scoped, tag = 'internal scratch']
  #allocation2 [shape = 'f32[1,1]{1,0:T(1,128)S(1)}', space=vmem, size = 0x200, scoped, tag = 'scoped memory for tpu_custom_call.1']
  %s0 = inlined_call_operand.vmem [shape: f32[8,10], index: 0, kind: input, shape index: {}]
  %s1 = inlined_call_operand.vmem [shape: f32[8,1], index: 1, kind: input, shape index: {}]
  %s2 = inlined_call_operand.vmem [shape: f32[8,1], index: 2, kind: input, shape index: {}]
  %s3 = inlined_call_operand.<no memory space> [shape: f32[1,1], index: 3, kind: input, shape index: {}]
  %s4 = inlined_call_operand.vmem [shape: f32[1024,10], index: 4, kind: input, shape index: {}]
  %s5 = inlined_call_operand.hbm [shape: f32[1,1024], index: 5, kind: output, shape index: {}]
  %s6 = sld [smem:[#allocation0]]
  $region53: #{tpu_custom_call.1} parent=0
    _
  %s8 = ssub.s32 1, %s6
  %s9 = scalar_select 0, %s8, %s6
  %v10 = vstv %s3
  %11 = vst [vmem:[#allocation2] sm:$0x1] %v10
  $region1: #{tpu_custom_call.1} parent=0
    #allocation3 [shape = 'u8[4096]{0}', space=vmem, size = 0x1000, scoped, tag = 'output window, operand 0']
    #allocation4 [shape = 's32[2]{0}', space=sflag, size = 0x8, scoped, tag = 'scoped memory for tpu_custom_call.1']
    %12 = vsyncpa [#allocation4], 0
    %s13 = scalar_lea.sflag [#allocation4], 1
    %14 = vsyncpa %s13, 0
    loop: start=0, step=1, limit=4
    $region2: #{tpu_custom_call.1} parent=1 // loop_pre_header
      _
    $region3: #{tpu_custom_call.1} parent=1 // loop_header
      %s16 = sphi 0, %s20
      %p17 = scmp.ge.s32.totalorder %s16, 4
      %s24 = sphi 0, %s24
      %s26 = sphi 0, %s24
      %s27 = sphi 0, %s26
      %s41 = sphi 0, %s27
      %s45 = sphi 0, %s45
      %s47 = sphi 0, %s45
      %s48 = sphi 0, %s47
      %s62 = sphi 0, %s48
      %s66 = sphi 0, %s66
      %s68 = sphi 0, %s66
      %s69 = sphi 0, %s68
      %s83 = sphi 0, %s69
      %s87 = sphi 0, %s87
      %s89 = sphi 0, %s87
      %s90 = sphi 0, %s89
      %s104 = sphi 0, %s90
      %s110 = sphi 0, %s112
      %s113 = sphi 0, %s110
      %s114 = sphi 0, %s113
      %s130 = sphi 0, %s114
      %s136 = sphi 0, %s138
      %s139 = sphi 0, %s136
      %s140 = sphi 0, %s139
      %s156 = sphi 0, %s140
    $region4: #{tpu_custom_call.1} parent=1 // loop_header_branch
      %19 = sbr.rel (%p17) target = $region8
    $region5: #{tpu_custom_call.1} parent=1 // loop_body
      %s21 = ssub.s32 %s16, 1
      %s22 = ssub.s32 %s16, 2
      %s23 = sadd.s32 %s16, 1
      %s25 = sadd.s32 %s24, 1
      %p28 = scmp.eq.s32.totalorder %s16, 1
      %p29 = scmp.ne.s32.totalorder %s24, %s26
      %p30 = scmp.eq.s32.totalorder %s16, 0
      %p31 = por %p29, %p30
      %p32 = scmp.ne.s32.totalorder %s24, %s26
      %p33 = scmp.eq.s32.totalorder %s21, 1
      %p34 = por %p32, %p33
      %p35 = scmp.ne.s32.totalorder %s26, %s27
      %p36 = scmp.eq.s32.totalorder %s21, 0
      %p37 = por %p35, %p36
      %p38 = scmp.ne.s32.totalorder %s26, %s27
      %p39 = scmp.eq.s32.totalorder %s22, 1
      %p40 = por %p38, %p39
      %p42 = scmp.ne.s32.totalorder %s27, %s41
      %p43 = scmp.eq.s32.totalorder %s22, 0
      %p44 = por %p42, %p43
      %s46 = sadd.s32 %s45, 1
      %p49 = scmp.eq.s32.totalorder %s16, 1
      %p50 = scmp.ne.s32.totalorder %s45, %s47
      %p51 = scmp.eq.s32.totalorder %s16, 0
      %p52 = por %p50, %p51
      %p53 = scmp.ne.s32.totalorder %s45, %s47
      %p54 = scmp.eq.s32.totalorder %s21, 1
      %p55 = por %p53, %p54
      %p56 = scmp.ne.s32.totalorder %s47, %s48
      %p57 = scmp.eq.s32.totalorder %s21, 0
      %p58 = por %p56, %p57
      %p59 = scmp.ne.s32.totalorder %s47, %s48
      %p60 = scmp.eq.s32.totalorder %s22, 1
      %p61 = por %p59, %p60
      %p63 = scmp.ne.s32.totalorder %s48, %s62
      %p64 = scmp.eq.s32.totalorder %s22, 0
      %p65 = por %p63, %p64
      %s67 = sadd.s32 %s66, 1
      %p70 = scmp.eq.s32.totalorder %s16, 1
      %p71 = scmp.ne.s32.totalorder %s66, %s68
      %p72 = scmp.eq.s32.totalorder %s16, 0
      %p73 = por %p71, %p72
      %p74 = scmp.ne.s32.totalorder %s66, %s68
      %p75 = scmp.eq.s32.totalorder %s21, 1
      %p76 = por %p74, %p75
      %p77 = scmp.ne.s32.totalorder %s68, %s69
      %p78 = scmp.eq.s32.totalorder %s21, 0
      %p79 = por %p77, %p78
      %p80 = scmp.ne.s32.totalorder %s68, %s69
      %p81 = scmp.eq.s32.totalorder %s22, 1
      %p82 = por %p80, %p81
      %p84 = scmp.ne.s32.totalorder %s69, %s83
      %p85 = scmp.eq.s32.totalorder %s22, 0
      %p86 = por %p84, %p85
      %s88 = sadd.s32 %s87, 1
      %p91 = scmp.eq.s32.totalorder %s16, 1
      %p92 = scmp.ne.s32.totalorder %s87, %s89
      %p93 = scmp.eq.s32.totalorder %s16, 0
      %p94 = por %p92, %p93
      %p95 = scmp.ne.s32.totalorder %s87, %s89
      %p96 = scmp.eq.s32.totalorder %s21, 1
      %p97 = por %p95, %p96
      %p98 = scmp.ne.s32.totalorder %s89, %s90
      %p99 = scmp.eq.s32.totalorder %s21, 0
      %p100 = por %p98, %p99
      %p101 = scmp.ne.s32.totalorder %s89, %s90
      %p102 = scmp.eq.s32.totalorder %s22, 1
      %p103 = por %p101, %p102
      %p105 = scmp.ne.s32.totalorder %s90, %s104
      %p106 = scmp.eq.s32.totalorder %s22, 0
      %p107 = por %p105, %p106
      %s108 = ssub.s32 %s16, %s23
      %p109 = scmp.eq.s32.totalorder %s108, 0
      %s111 = sadd.s32 %s110, 1
      %s112 = scalar_select %p109, %s110, %s111
      %p115 = pneg %p109
      %p116 = scmp.eq.s32.totalorder %s16, 1
      %p117 = por %p115, %p116
      %p118 = scmp.ne.s32.totalorder %s110, %s113
      %p119 = scmp.eq.s32.totalorder %s16, 0
      %p120 = por %p118, %p119
      %p121 = scmp.ne.s32.totalorder %s110, %s113
      %p122 = scmp.eq.s32.totalorder %s21, 1
      %p123 = por %p121, %p122
      %p124 = scmp.ne.s32.totalorder %s113, %s114
      %p125 = scmp.eq.s32.totalorder %s21, 0
      %p126 = por %p124, %p125
      %p127 = scmp.ne.s32.totalorder %s113, %s114
      %p128 = scmp.eq.s32.totalorder %s22, 1
      %p129 = por %p127, %p128
      %p131 = scmp.ne.s32.totalorder %s114, %s130
      %p132 = scmp.eq.s32.totalorder %s22, 0
      %p133 = por %p131, %p132
      %s134 = ssub.s32 %s16, %s23
      %p135 = scmp.eq.s32.totalorder %s134, 0
      %s137 = sadd.s32 %s136, 1
      %s138 = scalar_select %p135, %s136, %s137
      %p141 = pneg %p135
      %p142 = scmp.eq.s32.totalorder %s16, 1
      %p143 = por %p141, %p142
      %p144 = scmp.ne.s32.totalorder %s136, %s139
      %p145 = scmp.eq.s32.totalorder %s16, 0
      %p146 = por %p144, %p145
      %p147 = scmp.ne.s32.totalorder %s136, %s139
      %p148 = scmp.eq.s32.totalorder %s21, 1
      %p149 = por %p147, %p148
      %p150 = scmp.ne.s32.totalorder %s139, %s140
      %p151 = scmp.eq.s32.totalorder %s21, 0
      %p152 = por %p150, %p151
      %p153 = scmp.ne.s32.totalorder %s139, %s140
      %p154 = scmp.eq.s32.totalorder %s22, 1
      %p155 = por %p153, %p154
      %p157 = scmp.ne.s32.totalorder %s140, %s156
      %p158 = scmp.eq.s32.totalorder %s22, 0
      %p159 = por %p157, %p158
      %p160 = scmp.le.s32.totalorder 1, %s16
      %p161 = scmp.lt.s32.totalorder %s16, 3
      %p162 = pnand %p160, %p161
      %p163 = pneg %p162
      // Predicated region
      $region9: #{tpu_custom_call.1} parent=5 // pred_check
        _
      $region10: #{tpu_custom_call.1} parent=5 // pred_check_branch
        %165 = sbr.rel (%p162) target = $region12
      $region11: #{tpu_custom_call.1} parent=5 // pred_region
        %s166 = ssub.s32 %s16, 1
        // Predicated region
        $region13: #{tpu_custom_call.1} parent=11 // pred_check
          %p167 = pneg %p37
        $region14: #{tpu_custom_call.1} parent=11 // pred_check_branch
          %169 = sbr.rel (%p167) target = $region16
        $region15: #{tpu_custom_call.1} parent=11 // pred_region
          _
        $region16: #{tpu_custom_call.1} parent=11 // pred_fallthru
          _
        // Predicated region
        $region17: #{tpu_custom_call.1} parent=11 // pred_check
          %p170 = pneg %p58
        $region18: #{tpu_custom_call.1} parent=11 // pred_check_branch
          %172 = sbr.rel (%p170) target = $region20
        $region19: #{tpu_custom_call.1} parent=11 // pred_region
          _
        $region20: #{tpu_custom_call.1} parent=11 // pred_fallthru
          _
        // Predicated region
        $region21: #{tpu_custom_call.1} parent=11 // pred_check
          %p173 = pneg %p79
        $region22: #{tpu_custom_call.1} parent=11 // pred_check_branch
          %175 = sbr.rel (%p173) target = $region24
        $region23: #{tpu_custom_call.1} parent=11 // pred_region
          _
        $region24: #{tpu_custom_call.1} parent=11 // pred_fallthru
          _
        // Predicated region
        $region25: #{tpu_custom_call.1} parent=11 // pred_check
          %p176 = pneg %p100
        $region26: #{tpu_custom_call.1} parent=11 // pred_check_branch
          %178 = sbr.rel (%p176) target = $region28
        $region27: #{tpu_custom_call.1} parent=11 // pred_region
          _
        $region28: #{tpu_custom_call.1} parent=11 // pred_fallthru
          _
      $region12: #{tpu_custom_call.1} parent=5 // pred_fallthru
        _
      %p179 = scmp.lt.s32.totalorder %s16, 2
      // Predicated region
      $region29: #{tpu_custom_call.1} parent=5 // pred_check
        %p180 = pneg %p179
      $region30: #{tpu_custom_call.1} parent=5 // pred_check_branch
        %182 = sbr.rel (%p180) target = $region32
      $region31: #{tpu_custom_call.1} parent=5 // pred_region
        // Predicated region
        $region33: #{tpu_custom_call.1} parent=31 // pred_check
          %p183 = pneg %p120
        $region34: #{tpu_custom_call.1} parent=31 // pred_check_branch
          %185 = sbr.rel (%p183) target = $region36
        $region35: #{tpu_custom_call.1} parent=31 // pred_region
          %s186 = smul.u32 64, %s16
          %p187 = scmp.lt.s32.totalorder %s186, 127
          %s188 = scalar_select %p187, %s186, 127
          %s189 = smul.addr %s188, 8
          %s190 = scalar_lea.vmem %s4, %s189
          %s191 = smul.u32 64, %s16
        $region36: #{tpu_custom_call.1} parent=31 // pred_fallthru
          _
      $region32: #{tpu_custom_call.1} parent=5 // pred_fallthru
        _
      %p192 = scmp.le.s32.totalorder 1, %s16
      %p193 = scmp.lt.s32.totalorder %s16, 3
      %p194 = pnand %p192, %p193
      %p195 = pneg %p194
      // Predicated region
      $region37: #{tpu_custom_call.1} parent=5 // pred_check
        _
      $region38: #{tpu_custom_call.1} parent=5 // pred_check_branch
        %197 = sbr.rel (%p194) target = $region40
      $region39: #{tpu_custom_call.1} parent=5 // pred_region
        %s198 = ssub.s32 %s16, 1
        %p199 = pneg %p37
        %p200 = pneg %p34
        %p201 = pneg %p58
        %p202 = pneg %p55
        %p203 = pneg %p79
        %p204 = pneg %p76
        %p205 = pneg %p100
        %p206 = pneg %p97
        %s207 = smul.u32 64, %s21
        %p208 = scmp.lt.s32.totalorder %s207, 127
        %s209 = scalar_select %p208, %s207, 127
        %s210 = smul.addr %s209, 8
        %s211 = scalar_lea.vmem %s4, %s210
        %p212 = pneg %p126
        %p213 = pneg %p123
        %p214 = pneg %p152
        %p215 = pneg %p149
        %s216 = sand.u32 %s139, 1
        %s217 = scalar_lea.sflag [#allocation4], %s216
        %s218 = sand.u32 %s139, 1
        %s219 = smul.addr %s218, 4
        %s220 = scalar_lea.vmem [#allocation3], %s219
        %s221 = smul.u32 64, %s21
        %p222 = scmp.lt.s32.totalorder %s221, 127
        %s223 = scalar_select %p222, %s221, 127
        %s224 = smul.addr %s223, 8
        %s225 = scalar_lea.vmem %s4, %s224
        %s226 = smul.u32 64, %s21
        %s227 = smul.u32 4, %s21
        %v228 = vld [vmem:[%s225] sm:$0xff]
        %v229 = vld [vmem:[%s225 + $0x8] sm:$0xff]
        %v230 = vld [vmem:[%s225 + $0x10] sm:$0xff]
        %v231 = vld [vmem:[%s225 + $0x18] sm:$0xff]
        %v232 = vld [vmem:[%s225 + $0x20] sm:$0xff]
        %v233 = vld [vmem:[%s225 + $0x28] sm:$0xff]
        %v234 = vld [vmem:[%s225 + $0x30] sm:$0xff]
        %v235 = vld [vmem:[%s225 + $0x38] sm:$0xff]
        %v236 = vld [vmem:[%s225 + $0x40] sm:$0xff]
        %v237 = vld [vmem:[%s225 + $0x48] sm:$0xff]
        %v238 = vld [vmem:[%s225 + $0x50] sm:$0xff]
        %v239 = vld [vmem:[%s225 + $0x58] sm:$0xff]
        %v240 = vld [vmem:[%s225 + $0x60] sm:$0xff]
        %v241 = vld [vmem:[%s225 + $0x68] sm:$0xff]
        %v242 = vld [vmem:[%s225 + $0x70] sm:$0xff]
        %v243 = vld [vmem:[%s225 + $0x78] sm:$0xff]
        %v244 = vld [vmem:[%s225 + $0x80] sm:$0xff]
        %v245 = vld [vmem:[%s225 + $0x88] sm:$0xff]
        %v246 = vld [vmem:[%s225 + $0x90] sm:$0xff]
        %v247 = vld [vmem:[%s225 + $0x98] sm:$0xff]
        %v248 = vld [vmem:[%s225 + $0xa0] sm:$0xff]
        %v249 = vld [vmem:[%s225 + $0xa8] sm:$0xff]
        %v250 = vld [vmem:[%s225 + $0xb0] sm:$0xff]
        %v251 = vld [vmem:[%s225 + $0xb8] sm:$0xff]
        %v252 = vld [vmem:[%s225 + $0xc0] sm:$0xff]
        %v253 = vld [vmem:[%s225 + $0xc8] sm:$0xff]
        %v254 = vld [vmem:[%s225 + $0xd0] sm:$0xff]
        %v255 = vld [vmem:[%s225 + $0xd8] sm:$0xff]
        %v256 = vld [vmem:[%s225 + $0xe0] sm:$0xff]
        %v257 = vld [vmem:[%s225 + $0xe8] sm:$0xff]
        %v258 = vld [vmem:[%s225 + $0xf0] sm:$0xff]
        %v259 = vld [vmem:[%s225 + $0xf8] sm:$0xff]
        %v260 = vld [vmem:[%s225 + $0x100] sm:$0xff]
        %v261 = vld [vmem:[%s225 + $0x108] sm:$0xff]
        %v262 = vld [vmem:[%s225 + $0x110] sm:$0xff]
        %v263 = vld [vmem:[%s225 + $0x118] sm:$0xff]
        %v264 = vld [vmem:[%s225 + $0x120] sm:$0xff]
        %v265 = vld [vmem:[%s225 + $0x128] sm:$0xff]
        %v266 = vld [vmem:[%s225 + $0x130] sm:$0xff]
        %v267 = vld [vmem:[%s225 + $0x138] sm:$0xff]
        %v268 = vld [vmem:[%s225 + $0x140] sm:$0xff]
        %v269 = vld [vmem:[%s225 + $0x148] sm:$0xff]
        %v270 = vld [vmem:[%s225 + $0x150] sm:$0xff]
        %v271 = vld [vmem:[%s225 + $0x158] sm:$0xff]
        %v272 = vld [vmem:[%s225 + $0x160] sm:$0xff]
        %v273 = vld [vmem:[%s225 + $0x168] sm:$0xff]
        %v274 = vld [vmem:[%s225 + $0x170] sm:$0xff]
        %v275 = vld [vmem:[%s225 + $0x178] sm:$0xff]
        %v276 = vld [vmem:[%s225 + $0x180] sm:$0xff]
        %v277 = vld [vmem:[%s225 + $0x188] sm:$0xff]
        %v278 = vld [vmem:[%s225 + $0x190] sm:$0xff]
        %v279 = vld [vmem:[%s225 + $0x198] sm:$0xff]
        %v280 = vld [vmem:[%s225 + $0x1a0] sm:$0xff]
        %v281 = vld [vmem:[%s225 + $0x1a8] sm:$0xff]
        %v282 = vld [vmem:[%s225 + $0x1b0] sm:$0xff]
        %v283 = vld [vmem:[%s225 + $0x1b8] sm:$0xff]
        %v284 = vld [vmem:[%s225 + $0x1c0] sm:$0xff]
        %v285 = vld [vmem:[%s225 + $0x1c8] sm:$0xff]
        %v286 = vld [vmem:[%s225 + $0x1d0] sm:$0xff]
        %v287 = vld [vmem:[%s225 + $0x1d8] sm:$0xff]
        %v288 = vld [vmem:[%s225 + $0x1e0] sm:$0xff]
        %v289 = vld [vmem:[%s225 + $0x1e8] sm:$0xff]
        %v290 = vld [vmem:[%s225 + $0x1f0] sm:$0xff]
        %v291 = vld [vmem:[%s225 + $0x1f8] sm:$0xff]
        %v292 = vld [vmem:[%s0] sm:$0xff]
        %v293 = vld [vmem:[%s1] sm:$0xff]
        %295 = vset.pattern.permute.xlu0 0
        %296 = vperm.xlu0 %295, %v293
        %v297 = vpop.permute.xlu0 %296
        %vm299 = vcmask 80896
        %v301 = vsel %vm299, %v292, 0
        %v304 = vsel %vm299, %v228, 0
        %v307 = vsel %vm299, %v229, 0
        %v310 = vsel %vm299, %v230, 0
        %v313 = vsel %vm299, %v231, 0
        %v316 = vsel %vm299, %v232, 0
        %v319 = vsel %vm299, %v233, 0
        %v322 = vsel %vm299, %v234, 0
        %v325 = vsel %vm299, %v235, 0
        %v328 = vsel %vm299, %v236, 0
        %v331 = vsel %vm299, %v237, 0
        %v334 = vsel %vm299, %v238, 0
        %v337 = vsel %vm299, %v239, 0
        %v340 = vsel %vm299, %v240, 0
        %v343 = vsel %vm299, %v241, 0
        %v346 = vsel %vm299, %v242, 0
        %v349 = vsel %vm299, %v243, 0
        %v352 = vsel %vm299, %v244, 0
        %v355 = vsel %vm299, %v245, 0
        %v358 = vsel %vm299, %v246, 0
        %v361 = vsel %vm299, %v247, 0
        %v364 = vsel %vm299, %v248, 0
        %v367 = vsel %vm299, %v249, 0
        %v370 = vsel %vm299, %v250, 0
        %v373 = vsel %vm299, %v251, 0
        %v376 = vsel %vm299, %v252, 0
        %v379 = vsel %vm299, %v253, 0
        %v382 = vsel %vm299, %v254, 0
        %v385 = vsel %vm299, %v255, 0
        %v388 = vsel %vm299, %v256, 0
        %v391 = vsel %vm299, %v257, 0
        %v394 = vsel %vm299, %v258, 0
        %v397 = vsel %vm299, %v259, 0
        %v400 = vsel %vm299, %v260, 0
        %v403 = vsel %vm299, %v261, 0
        %v406 = vsel %vm299, %v262, 0
        %v409 = vsel %vm299, %v263, 0
        %v412 = vsel %vm299, %v264, 0
        %v415 = vsel %vm299, %v265, 0
        %v418 = vsel %vm299, %v266, 0
        %v421 = vsel %vm299, %v267, 0
        %v424 = vsel %vm299, %v268, 0
        %v427 = vsel %vm299, %v269, 0
        %v430 = vsel %vm299, %v270, 0
        %v433 = vsel %vm299, %v271, 0
        %v436 = vsel %vm299, %v272, 0
        %v439 = vsel %vm299, %v273, 0
        %v442 = vsel %vm299, %v274, 0
        %v445 = vsel %vm299, %v275, 0
        %v448 = vsel %vm299, %v276, 0
        %v451 = vsel %vm299, %v277, 0
        %v454 = vsel %vm299, %v278, 0
        %v457 = vsel %vm299, %v279, 0
        %v460 = vsel %vm299, %v280, 0
        %v463 = vsel %vm299, %v281, 0
        %v466 = vsel %vm299, %v282, 0
        %v469 = vsel %vm299, %v283, 0
        %v472 = vsel %vm299, %v284, 0
        %v475 = vsel %vm299, %v285, 0
        %v478 = vsel %vm299, %v286, 0
        %v481 = vsel %vm299, %v287, 0
        %v484 = vsel %vm299, %v288, 0
        %v487 = vsel %vm299, %v289, 0
        %v490 = vsel %vm299, %v290, 0
        %v493 = vsel %vm299, %v291, 0
        %495 = vmatprep.subr.mxu0 0.0
        %496 = vmatpush1.xpose.msra.mxu0 %v349
        %497 = vmatprep.subr.mxu0 0.0
        %498 = vmatpush1.xpose.msra.mxu0 %v346
        %499 = vmatprep.subr.mxu0 0.0
        %500 = vmatpush1.xpose.msra.mxu0 %v343
        %501 = vmatprep.subr.mxu0 0.0
        %502 = vmatpush1.xpose.msra.mxu0 %v340
        %503 = vmatprep.subr.mxu0 0.0
        %504 = vmatpush1.xpose.msra.mxu0 %v337
        %505 = vmatprep.subr.mxu0 0.0
        %506 = vmatpush1.xpose.msra.mxu0 %v334
        %507 = vmatprep.subr.mxu0 0.0
        %508 = vmatpush1.xpose.msra.mxu0 %v331
        %509 = vmatprep.subr.mxu0 0.0
        %510 = vmatpush1.xpose.msra.mxu0 %v328
        %511 = vmatprep.subr.mxu0 0.0
        %512 = vmatpush1.xpose.msra.mxu0 %v325
        %513 = vmatprep.subr.mxu0 0.0
        %514 = vmatpush1.xpose.msra.mxu0 %v322
        %515 = vmatprep.subr.mxu0 0.0
        %516 = vmatpush1.xpose.msra.mxu0 %v319
        %517 = vmatprep.subr.mxu0 0.0
        %518 = vmatpush1.xpose.msra.mxu0 %v316
        %519 = vmatprep.subr.mxu0 0.0
        %520 = vmatpush1.xpose.msra.mxu0 %v313
        %521 = vmatprep.subr.mxu0 0.0
        %522 = vmatpush1.xpose.msra.mxu0 %v310
        %523 = vmatprep.subr.mxu0 0.0
        %524 = vmatpush1.xpose.msra.mxu0 %v307
        %525 = vmatprep.subr.mxu0 0.0
        %526 = vmatpush1.xpose.msra.mxu0 %v304
        %527 = vmatprep.subr.mxu0 0.0
        %528 = vmatpush2.xpose.msra.mxu0 %v397
        %529 = vmatprep.subr.mxu0 0.0
        %530 = vmatpush2.xpose.msra.mxu0 %v394
        %531 = vmatprep.subr.mxu0 0.0
        %532 = vmatpush2.xpose.msra.mxu0 %v391
        %533 = vmatprep.subr.mxu0 0.0
        %534 = vmatpush2.xpose.msra.mxu0 %v388
        %535 = vmatprep.subr.mxu0 0.0
        %536 = vmatpush2.xpose.msra.mxu0 %v385
        %537 = vmatprep.subr.mxu0 0.0
        %538 = vmatpush2.xpose.msra.mxu0 %v382
        %539 = vmatprep.subr.mxu0 0.0
        %540 = vmatpush2.xpose.msra.mxu0 %v379
        %541 = vmatprep.subr.mxu0 0.0
        %542 = vmatpush2.xpose.msra.mxu0 %v376
        %543 = vmatprep.subr.mxu0 0.0
        %544 = vmatpush2.xpose.msra.mxu0 %v373
        %545 = vmatprep.subr.mxu0 0.0
        %546 = vmatpush2.xpose.msra.mxu0 %v370
        %547 = vmatprep.subr.mxu0 0.0
        %548 = vmatpush2.xpose.msra.mxu0 %v367
        %549 = vmatprep.subr.mxu0 0.0
        %550 = vmatpush2.xpose.msra.mxu0 %v364
        %551 = vmatprep.subr.mxu0 0.0
        %552 = vmatpush2.xpose.msra.mxu0 %v361
        %553 = vmatprep.subr.mxu0 0.0
        %554 = vmatpush2.xpose.msra.mxu0 %v358
        %555 = vmatprep.subr.mxu0 0.0
        %556 = vmatpush2.xpose.msra.mxu0 %v355
        %557 = vmatprep.subr.mxu0 0.0
        %558 = vmatpush2.xpose.msra.mxu0 %v352
        %559 = vmatprep.mubr.f32.mxu0 0.0
        %560 = vmatmul.mubr.f32.gmra.mxu0 %v301
        %v561 = vpop.f32.mrf.mxu0
        %v562 = vadd.f32 %v297, %v561
        %v563 = vpop.f32.mrf.mxu0
        %v564 = vadd.f32 %v297, %v563
        %565 = vdwg.mxu0
        %566 = vmatprep.subr.mxu0 0.0
        %567 = vmatpush1.xpose.msra.mxu0 %v445
        %568 = vmatprep.subr.mxu0 0.0
        %569 = vmatpush1.xpose.msra.mxu0 %v442
        %570 = vmatprep.subr.mxu0 0.0
        %571 = vmatpush1.xpose.msra.mxu0 %v439
        %572 = vmatprep.subr.mxu0 0.0
        %573 = vmatpush1.xpose.msra.mxu0 %v436
        %574 = vmatprep.subr.mxu0 0.0
        %575 = vmatpush1.xpose.msra.mxu0 %v433
        %576 = vmatprep.subr.mxu0 0.0
        %577 = vmatpush1.xpose.msra.mxu0 %v430
        %578 = vmatprep.subr.mxu0 0.0
        %579 = vmatpush1.xpose.msra.mxu0 %v427
        %580 = vmatprep.subr.mxu0 0.0
        %581 = vmatpush1.xpose.msra.mxu0 %v424
        %582 = vmatprep.subr.mxu0 0.0
        %583 = vmatpush1.xpose.msra.mxu0 %v421
        %584 = vmatprep.subr.mxu0 0.0
        %585 = vmatpush1.xpose.msra.mxu0 %v418
        %586 = vmatprep.subr.mxu0 0.0
        %587 = vmatpush1.xpose.msra.mxu0 %v415
        %588 = vmatprep.subr.mxu0 0.0
        %589 = vmatpush1.xpose.msra.mxu0 %v412
        %590 = vmatprep.subr.mxu0 0.0
        %591 = vmatpush1.xpose.msra.mxu0 %v409
        %592 = vmatprep.subr.mxu0 0.0
        %593 = vmatpush1.xpose.msra.mxu0 %v406
        %594 = vmatprep.subr.mxu0 0.0
        %595 = vmatpush1.xpose.msra.mxu0 %v403
        %596 = vmatprep.subr.mxu0 0.0
        %597 = vmatpush1.xpose.msra.mxu0 %v400
        %598 = vmatprep.subr.mxu0 0.0
        %599 = vmatpush2.xpose.msra.mxu0 %v493
        %600 = vmatprep.subr.mxu0 0.0
        %601 = vmatpush2.xpose.msra.mxu0 %v490
        %602 = vmatprep.subr.mxu0 0.0
        %603 = vmatpush2.xpose.msra.mxu0 %v487
        %604 = vmatprep.subr.mxu0 0.0
        %605 = vmatpush2.xpose.msra.mxu0 %v484
        %606 = vmatprep.subr.mxu0 0.0
        %607 = vmatpush2.xpose.msra.mxu0 %v481
        %608 = vmatprep.subr.mxu0 0.0
        %609 = vmatpush2.xpose.msra.mxu0 %v478
        %610 = vmatprep.subr.mxu0 0.0
        %611 = vmatpush2.xpose.msra.mxu0 %v475
        %612 = vmatprep.subr.mxu0 0.0
        %613 = vmatpush2.xpose.msra.mxu0 %v472
        %614 = vmatprep.subr.mxu0 0.0
        %615 = vmatpush2.xpose.msra.mxu0 %v469
        %616 = vmatprep.subr.mxu0 0.0
        %617 = vmatpush2.xpose.msra.mxu0 %v466
        %618 = vmatprep.subr.mxu0 0.0
        %619 = vmatpush2.xpose.msra.mxu0 %v463
        %620 = vmatprep.subr.mxu0 0.0
        %621 = vmatpush2.xpose.msra.mxu0 %v460
        %622 = vmatprep.subr.mxu0 0.0
        %623 = vmatpush2.xpose.msra.mxu0 %v457
        %624 = vmatprep.subr.mxu0 0.0
        %625 = vmatpush2.xpose.msra.mxu0 %v454
        %626 = vmatprep.subr.mxu0 0.0
        %627 = vmatpush2.xpose.msra.mxu0 %v451
        %628 = vmatprep.subr.mxu0 0.0
        %629 = vmatpush2.xpose.msra.mxu0 %v448
        %630 = vmatprep.mubr.f32.mxu0 0.0
        %631 = vmatmul.mubr.f32.gmra.mxu0 %v301
        %v632 = vpop.f32.mrf.mxu0
        %v633 = vadd.f32 %v297, %v632
        %v634 = vpop.f32.mrf.mxu0
        %v635 = vadd.f32 %v297, %v634
        %636 = vdwg.mxu0
        %v637 = vmax.f32 %v562, 0.0
        %v638 = vmax.f32 %v564, 0.0
        %v639 = vmax.f32 %v633, 0.0
        %v640 = vmax.f32 %v635, 0.0
        %v641 = vld [vmem:[%s2] sm:$0xff]
        %643 = vset.pattern.permute.xlu0 0
        %644 = vperm.xlu0 %643, %v641
        %v645 = vpop.permute.xlu0 %644
        %v647 = vmul.f32 %v637, %v645
        %v648 = vmul.f32 %v638, %v645
        %v649 = vmul.f32 %v639, %v645
        %v650 = vmul.f32 %v640, %v645
        %v651 = vrot.slane %v647, 4
        %v652 = vadd.f32 %v647, %v651
        %v653 = vrot.slane %v652, 2
        %v654 = vadd.f32 %v652, %v653
        %v655 = vrot.slane %v654, 1
        %v656 = vadd.f32 %v654, %v655
        %v657 = vrot.slane %v648, 4
        %v658 = vadd.f32 %v648, %v657
        %v659 = vrot.slane %v658, 2
        %v660 = vadd.f32 %v658, %v659
        %v661 = vrot.slane %v660, 1
        %v662 = vadd.f32 %v660, %v661
        %v663 = vrot.slane %v649, 4
        %v664 = vadd.f32 %v649, %v663
        %v665 = vrot.slane %v664, 2
        %v666 = vadd.f32 %v664, %v665
        %v667 = vrot.slane %v666, 1
        %v668 = vadd.f32 %v666, %v667
        %v669 = vrot.slane %v650, 4
        %v670 = vadd.f32 %v650, %v669
        %v671 = vrot.slane %v670, 2
        %v672 = vadd.f32 %v670, %v671
        %v673 = vrot.slane %v672, 1
        %v674 = vadd.f32 %v672, %v673
        %v675 = vld [vmem:[#allocation2] sm:$0x1]
        %677 = vset.pattern.permute.xlu0 0
        %678 = vperm.xlu0 %677, %v675
        %v679 = vpop.permute.xlu0 %678
        %v681 = vlaneseq
        %v682 = vshrl.u32 %v681, 7
        %v683 = vsub.s32 0, %v682
        %v684 = vrot.slane %v679, %v683
        %v685 = vadd.f32 %v656, %v684
        %v686 = vadd.f32 %v662, %v684
        %v687 = vadd.f32 %v668, %v684
        %v688 = vadd.f32 %v674, %v684
        %v693 = vcombine.low %v685, %v686
        %v694 = vcombine.low %v687, %v688
        %v696 = vunpack.c.l.s4 1966171168
        %v697 = vunpack.c.0.s8 %v696
        %v698 = vlaneseq
        %v699 = vshrl.u32 %v698, 7
        %v700 = vsub.s32 %v697, %v699
        %v701 = vrot.slane %v693, %v700
        %v703 = vunpack.c.l.s4 1966171168
        %v704 = vunpack.c.0.s8 %v703
        %v705 = vlaneseq
        %v706 = vshrl.u32 %v705, 7
        %v707 = vsub.s32 %v704, %v706
        %v708 = vrot.slane %v694, %v707
        %v709 = vcombine.low %v701, %v708
        %v711 = vunpack.c.l.s4 1966171168
        %v712 = vunpack.c.0.s8 %v711
        %v713 = vlaneseq
        %v714 = vshrl.u32 %v713, 7
        %v715 = vsub.s32 %v712, %v714
        %v716 = vrot.slane %v709, %v715
        %v718 = vlaneseq
        %vm719 = vcmp.ge.s32.totalorder %v718, 0
        %vm720 = vcmp.lt.s32.totalorder %v718, 512
        %vm721 = vmand %vm719, %vm720
        %722 = vst.msk [vmem:[%s220] sm:$0xf] %vm721, %v716
        %s723 = sand.u32 %s139, 1
        %s724 = scalar_lea.sflag [#allocation4], %s723
        %s725 = sand.u32 %s139, 1
        %s726 = smul.addr %s725, 4
        %s727 = scalar_lea.vmem [#allocation3], %s726
        // Predicated region
        $region41: #{tpu_custom_call.1} parent=39 // pred_check
          %p728 = pneg %p149
        $region42: #{tpu_custom_call.1} parent=39 // pred_check_branch
          %730 = sbr.rel (%p728) target = $region44
        $region43: #{tpu_custom_call.1} parent=39 // pred_region
          %s731 = smul.u32 4, %s21
          %s733 = ssub.s32 64, 64
          %734 = vsyncadd %s724, %s733
          %s735 = smul.addr %s731, 16
          %s736 = scalar_lea.hbm %s5, %s735
          %s738 = sshll.u32 %s727, 4
          %s739 = int_to_ptr.vmem [resolvable:$true] %s738
          %741 = dma.vmem_to_hbm [thread:$0]  %s739, 64, %s736, %s724
        $region44: #{tpu_custom_call.1} parent=39 // pred_fallthru
          _
      $region40: #{tpu_custom_call.1} parent=5 // pred_fallthru
        _
      %p742 = scmp.le.s32.totalorder 2, %s16
      // Predicated region
      $region45: #{tpu_custom_call.1} parent=5 // pred_check
        %p743 = pneg %p742
      $region46: #{tpu_custom_call.1} parent=5 // pred_check_branch
        %745 = sbr.rel (%p743) target = $region48
      $region47: #{tpu_custom_call.1} parent=5 // pred_region
        %s746 = ssub.s32 %s16, 2
        // Predicated region
        $region49: #{tpu_custom_call.1} parent=47 // pred_check
          %p747 = pneg %p155
        $region50: #{tpu_custom_call.1} parent=47 // pred_check_branch
          %749 = sbr.rel (%p747) target = $region52
        $region51: #{tpu_custom_call.1} parent=47 // pred_region
          %s750 = sand.u32 %s140, 1
          %s751 = scalar_lea.sflag [#allocation4], %s750
          %s752 = sand.u32 %s140, 1
          %s753 = smul.addr %s752, 4
          %s754 = scalar_lea.vmem [#allocation3], %s753
          %755 = dma.done %s751, 64
        $region52: #{tpu_custom_call.1} parent=47 // pred_fallthru
          _
      $region48: #{tpu_custom_call.1} parent=5 // pred_fallthru
        _
    $region6: #{tpu_custom_call.1} parent=1 // loop_footer
      %s20 = sadd.s32 1, %s16
    $region7: #{tpu_custom_call.1} parent=1 // loop_footer_branch
      %15 = sbr.rel target = $region3
    $region8: #{tpu_custom_call.1} parent=1 // loop_exit
      _
    %756 = vsyncpa [#allocation4], 1
    %s757 = scalar_lea.sflag [#allocation4], 1
    %758 = vsyncpa %s757, 1

</llo_original>
